<compile_context>
chip_gen: v7x
topology: tpu7x:2x2x1
jax: 0.10.0
libtpu: 0.0.40
codegen_flags: <defaults>
</compile_context>

<pallas_src>
import functools
import math

import jax
import jax.numpy as jnp
from jax.experimental import pallas as pl
from jax.experimental.pallas import tpu as pltpu

_MXU_DTYPE = jnp.bfloat16   # MXU operand dtype; accumulation is always f32
_LN_EPS = 1e-12             # espnet LayerNorm eps


# --------------------------------------------------------------------------
# small helpers
# --------------------------------------------------------------------------

def _round_up(x, m):
    return ((x + m - 1) // m) * m


def _row_tile(M, target=512):
    """Row tile for the HBM-bound GEMMs: large (~85% of HBM roofline at 512),
    8-aligned, and >=2 grid steps when possible so both v7x TensorCores get work."""
    if M <= 2 * target:
        half = _round_up(pl.cdiv(M, 2), 8)
        return M if half >= M else half
    return target


def _ct_tile(CT):
    """Lane tile for the (B, F, C*T) magnitude+projection kernel: a multiple of 128
    (or the full dim when CT < 128) so blocks satisfy the (8,128) rule."""
    if CT <= 128:
        return CT
    return min(512, (CT // 128) * 128)


def _vmem_cap_bytes():
    try:
        info = pltpu.get_tpu_info()
        phys = int(getattr(info, "vmem_capacity_bytes", 64 * 1024 * 1024))
    except Exception:
        phys = 64 * 1024 * 1024            # conservative fallback (v7x per-core VMEM)
    return min((phys * 3) // 4, 100 * 1024 * 1024)


def _cparams(semantics, est_vmem_bytes=0):
    """dimension_semantics + an explicit vmem limit whenever the estimate exceeds the
    smallest scoped-VMEM default across generations (16 MiB on v5e)."""
    kw = {}
    if est_vmem_bytes > 16 * 1024 * 1024:
        cap = _vmem_cap_bytes()
        kw["vmem_limit_bytes"] = int(min(max(est_vmem_bytes, 32 * 1024 * 1024), cap))
    return pltpu.CompilerParams(dimension_semantics=semantics, **kw)


# --------------------------------------------------------------------------
# Kernel 1: |X| magnitude fused with the input projection  (idim -> attention_dim)
#           Reads the UNtransposed spectrogram as (B, F, C*T) blocks and contracts
#           over F with a transposed-LHS GEMM -> writes (B, C*T, D) directly.
# --------------------------------------------------------------------------

def _mag_proj_kernel(re_ref, im_ref, w_ref, b_ref, o_ref):
    re = re_ref[0]                                   # (F, Tt) f32
    im = im_ref[0]
    mag = jnp.sqrt(re * re + im * im)                # VPU work, hidden under the MXU
    # transposed-LHS GEMM: contract the F (sublane) axis of both operands -> (Tt, D)
    acc = jax.lax.dot_general(
        mag.astype(_MXU_DTYPE), w_ref[...],
        (((0,), (0,)), ((), ())), preferred_element_type=jnp.float32) + b_ref[...]
    o_ref[0, :, :] = acc.astype(o_ref.dtype)


def magnitude_in_proj(re_bft, im_bft, w_bf16, b):
    B, F, CT = re_bft.shape
    D = w_bf16.shape[1]
    tt = _ct_tile(CT)
    est = (4 * (2 * 2 * F * tt)          # re/im blocks, double-buffered
           + 2 * (2 * F * D)             # bf16 weight, double-buffered
           + 4 * (2 * tt * D)            # out block
           + 4 * (F * tt + tt * D))      # live values
    return pl.pallas_call(
        _mag_proj_kernel,
        out_shape=jax.ShapeDtypeStruct((B, CT, D), jnp.float32),
        grid_spec=pltpu.PrefetchScalarGridSpec(
            num_scalar_prefetch=0,
            grid=(B, pl.cdiv(CT, tt)),
            in_specs=[
                pl.BlockSpec((1, F, tt), lambda b_, t: (b_, 0, t)),
                pl.BlockSpec((1, F, tt), lambda b_, t: (b_, 0, t)),
                pl.BlockSpec((F, D), lambda b_, t: (0, 0)),    # resident bf16 weight
                pl.BlockSpec((1, D), lambda b_, t: (0, 0)),
            ],
            out_specs=pl.BlockSpec((1, tt, D), lambda b_, t: (b_, t, 0)),
        ),
        compiler_params=_cparams(("parallel", "parallel"), est),
    )(re_bft, im_bft, w_bf16, b.reshape(1, D))


# --------------------------------------------------------------------------
# Kernel 2: one fused time-restricted encoder layer, gridded over (B*C,)
# --------------------------------------------------------------------------

def _layer_norm(x, g, b):
    mean = jnp.mean(x, axis=-1, keepdims=True)
    xc = x - mean
    var = jnp.mean(xc * xc, axis=-1, keepdims=True)
    return xc * jax.lax.rsqrt(var + _LN_EPS) * g + b


def _encoder_layer_kernel(ilens_ref,                      # scalar prefetch (SMEM)
                          h_ref, wqkv_ref, bqkv_ref, wo_ref, bo_ref,
                          g1_ref, beta1_ref, w1_ref, bf1_ref, w2_ref, bf2_ref,
                          g2_ref, beta2_ref,
                          o_ref,
                          qkv_ref,                        # VMEM scratch (T, 3D) bf16
                          *, n_heads, window, t_chunk, band):
    seq = pl.program_id(0)
    ilen = ilens_ref[seq]

    T, D = h_ref.shape[1], h_ref.shape[2]
    dk = D // n_heads
    pad_front = window // 2
    pad_end = window - pad_front - 1
    neg = jnp.float32(-1e30)
    n_chunks = pl.cdiv(T, t_chunk)

    g1, b1 = g1_ref[...], beta1_ref[...]
    g2, b2 = g2_ref[...], beta2_ref[...]
    bo, bf1, bf2 = bo_ref[...], bf1_ref[...], bf2_ref[...]

    # ---- pass 1: fused QKV projection, streamed chunk-by-chunk into bf16 scratch ----
    # (1/sqrt(dk) is already folded into the Wq / bq slice by the wrapper)
    @pl.loop(0, n_chunks)
    def _(ci):
        q0 = pl.multiple_of(jnp.minimum(ci * t_chunk, T - t_chunk), 8)
        hc = h_ref[0, pl.ds(q0, t_chunk), :]                        # (tq, D) f32
        qkv = jnp.dot(hc.astype(_MXU_DTYPE), wqkv_ref[...],
                      preferred_element_type=jnp.float32) + bqkv_ref[...]
        qkv_ref[pl.ds(q0, t_chunk), :] = qkv.astype(_MXU_DTYPE)

    # ---- pass 2: banded attention + Wo + LN + FF + LN per query chunk ----
    @pl.loop(0, n_chunks)
    def _(ci):
        q0 = pl.multiple_of(jnp.minimum(ci * t_chunk, T - t_chunk), 8)
        k0 = (jnp.maximum(q0 - pad_front, 0) // 8) * 8
        k0 = pl.multiple_of(jnp.minimum(k0, T - band), 8)

        q_rows = qkv_ref[pl.ds(q0, t_chunk), pl.ds(0, D)]           # (tq, D)  bf16
        k_rows = qkv_ref[pl.ds(k0, band), pl.ds(D, D)]              # (band, D) bf16
        v_rows = qkv_ref[pl.ds(k0, band), pl.ds(2 * D, D)]          # (band, D) bf16

        # time-restricted window + key-length mask rebuilt in-kernel (no HBM mask)
        q_pos = q0 + jax.lax.broadcasted_iota(jnp.int32, (t_chunk, band), 0)
        k_pos = k0 + jax.lax.broadcasted_iota(jnp.int32, (t_chunk, band), 1)
        valid = ((k_pos >= q_pos - pad_front) & (k_pos <= q_pos + pad_end)
                 & (k_pos < ilen))

        ctxs = []
        for hh in range(n_heads):                                   # small static loop
            lo = hh * dk
            q = q_rows[:, lo:lo + dk]
            k = k_rows[:, lo:lo + dk]
            v = v_rows[:, lo:lo + dk]
            s = jax.lax.dot_general(q, k, (((1,), (1,)), ((), ())),
                                    preferred_element_type=jnp.float32)   # (tq, band)
            s = jnp.where(valid, s, neg)
            m = jnp.max(s, axis=-1, keepdims=True)
            e = jnp.exp(s - m)   # masked keys underflow to exactly 0 -> no post-where
            p = e * pl.reciprocal(jnp.sum(e, axis=-1, keepdims=True), approx=True)
            ctxs.append(jnp.dot(p.astype(_MXU_DTYPE), v,
                                preferred_element_type=jnp.float32))      # (tq, dk)

        ctx = jnp.concatenate(ctxs, axis=-1)                        # (tq, D) f32
        # reference zeroes attention weights on fully-masked rows -> zero the context
        q_vec = q0 + jax.lax.broadcasted_iota(jnp.int32, (t_chunk, 1), 0)
        ctx = jnp.where(q_vec < ilen + pad_front, ctx, 0.0)
        att = jnp.dot(ctx.astype(_MXU_DTYPE), wo_ref[...],          # single K=D GEMM
                      preferred_element_type=jnp.float32) + bo

        # post-norm encoder layer (normalize_before=False); dropout = identity
        hc = h_ref[0, pl.ds(q0, t_chunk), :]
        x1 = _layer_norm(hc + att, g1, b1)
        ffh = jnp.maximum(jnp.dot(x1.astype(_MXU_DTYPE), w1_ref[...],
                                  preferred_element_type=jnp.float32) + bf1, 0.0)
        ff = jnp.dot(ffh.astype(_MXU_DTYPE), w2_ref[...],
                     preferred_element_type=jnp.float32) + bf2
        x2 = _layer_norm(x1 + ff, g2, b2)
        o_ref[0, pl.ds(q0, t_chunk), :] = x2.astype(o_ref.dtype)


def encoder_layer(h, ilens_bc, wqkv, bqkv, wo, bo, g1, be1, w1, bf1, w2, bf2, g2, be2,
                  *, n_heads, window):
    BC, T, D = h.shape
    U = w1.shape[1]
    # 256 query rows fill the 256x256 MXU of v6e/v7x; clamp to T for short inputs.
    t_chunk = min(256, T)
    # key band: window span + 8-alignment slack, clamped to T (all multiples of 8)
    band = min(T, _round_up(t_chunk + window + 6, 8))
    est = (4 * 2 * 2 * T * D                                  # h in + out, dbl-buffered
           + 2 * T * 3 * D                                    # bf16 QKV scratch
           + 2 * 2 * (3 * D * D + D * D + D * U + U * D)      # bf16 weights, dbl-buffered
           + 4 * t_chunk * (2 * band + 6 * D + U))            # live chunk values (rough)

    def r2(v):
        return v.reshape(1, -1)

    grid_spec = pltpu.PrefetchScalarGridSpec(
        num_scalar_prefetch=1,                                 # ilens -> SMEM
        grid=(BC,),
        in_specs=[
            pl.BlockSpec((1, T, D), lambda s, il: (s, 0, 0)),      # h
            pl.BlockSpec((D, 3 * D), lambda s, il: (0, 0)),        # Wqkv (bf16, resident)
            pl.BlockSpec((1, 3 * D), lambda s, il: (0, 0)),        # bqkv
            pl.BlockSpec((D, D), lambda s, il: (0, 0)),            # Wo   (bf16)
            pl.BlockSpec((1, D), lambda s, il: (0, 0)),            # bo
            pl.BlockSpec((1, D), lambda s, il: (0, 0)),            # ln1 gamma
            pl.BlockSpec((1, D), lambda s, il: (0, 0)),            # ln1 beta
            pl.BlockSpec((D, U), lambda s, il: (0, 0)),            # ff W1 (bf16)
            pl.BlockSpec((1, U), lambda s, il: (0, 0)),            # ff b1
            pl.BlockSpec((U, D), lambda s, il: (0, 0)),            # ff W2 (bf16)
            pl.BlockSpec((1, D), lambda s, il: (0, 0)),            # ff b2
            pl.BlockSpec((1, D), lambda s, il: (0, 0)),            # ln2 gamma
            pl.BlockSpec((1, D), lambda s, il: (0, 0)),            # ln2 beta
        ],
        out_specs=pl.BlockSpec((1, T, D), lambda s, il: (s, 0, 0)),
        scratch_shapes=[pltpu.VMEM((T, 3 * D), _MXU_DTYPE)],       # bf16 QKV scratch
    )
    return pl.pallas_call(
        functools.partial(_encoder_layer_kernel, n_heads=n_heads, window=window,
                          t_chunk=t_chunk, band=band),
        out_shape=jax.ShapeDtypeStruct((BC, T, D), jnp.float32),
        grid_spec=grid_spec,
        compiler_params=_cparams(("parallel",), est),
    )(ilens_bc, h, wqkv, r2(bqkv), wo, r2(bo), r2(g1), r2(be1),
      w1, r2(bf1), w2, r2(bf2), r2(g2), r2(be2))


# --------------------------------------------------------------------------
# Kernel 3: all nmask sigmoid mask heads fused into one matmul
# --------------------------------------------------------------------------

def _mask_heads_kernel(x_ref, w_ref, b_ref, o_ref):
    acc = jnp.dot(x_ref[...].astype(_MXU_DTYPE), w_ref[...],
                  preferred_element_type=jnp.float32) + b_ref[...]
    o_ref[...] = jax.nn.sigmoid(acc).astype(o_ref.dtype)


def mask_heads(x, w_bf16, b):
    M, D = x.shape
    N = w_bf16.shape[1]
    tm = _row_tile(M)
    est = 4 * (2 * tm * D) + 2 * (2 * D * N) + 4 * (2 * tm * N) + 4 * tm * N
    return pl.pallas_call(
        _mask_heads_kernel,
        out_shape=jax.ShapeDtypeStruct((M, N), jnp.float32),
        grid_spec=pltpu.PrefetchScalarGridSpec(
            num_scalar_prefetch=0,
            grid=(pl.cdiv(M, tm),),
            in_specs=[
                pl.BlockSpec((tm, D), lambda i: (i, 0)),
                pl.BlockSpec((D, N), lambda i: (0, 0)),
                pl.BlockSpec((1, N), lambda i: (0, 0)),
            ],
            out_specs=pl.BlockSpec((tm, N), lambda i: (i, 0)),
        ),
        compiler_params=_cparams(("parallel",), est),
    )(x, w_bf16, b.reshape(1, N))


# --------------------------------------------------------------------------
# Parameters (deterministic synthetic init) and forward pass
# --------------------------------------------------------------------------

def _dense(key, din, dout):
    w = jax.random.normal(key, (din, dout), jnp.float32) * 0.1
    b = jnp.zeros((dout,), jnp.float32)
    return (w, b)


def init_params(key, idim, adim, units, num_blocks, nmask):
    keys = jax.random.split(key, 2 + num_blocks)
    params = {"in_proj": _dense(keys[0], idim, adim), "layers": [], "mask_linears": []}
    for li in range(num_blocks):
        lk = jax.random.split(keys[2 + li], 6)
        params["layers"].append({
            "wq": _dense(lk[0], adim, adim),
            "wk": _dense(lk[1], adim, adim),
            "wv": _dense(lk[2], adim, adim),
            "wo": _dense(lk[3], adim, adim),
            "ln1": (jnp.ones((adim,), jnp.float32), jnp.zeros((adim,), jnp.float32)),
            "ff1": _dense(lk[4], adim, units),
            "ff2": _dense(lk[5], units, adim),
            "ln2": (jnp.ones((adim,), jnp.float32), jnp.zeros((adim,), jnp.float32)),
        })
    mkeys = jax.random.split(keys[1], nmask)
    for mi in range(nmask):
        params["mask_linears"].append(_dense(mkeys[mi], adim, idim))
    return params


def mask_estimator_forward(params, xs_real, xs_imag, ilens, *, n_heads, window):
    B, Freq, C, T = xs_real.shape
    BC = B * C

    w0, b0 = params["in_proj"]
    D = w0.shape[1]
    dk = D // n_heads
    scale = 1.0 / math.sqrt(dk)

    # (B, F, C, T) -> (B, F, C*T): contiguous trailing-dim merge, no HBM transpose pass.
    re = xs_real.reshape(B, Freq, C * T)
    im = xs_imag.reshape(B, Freq, C * T)
    h = magnitude_in_proj(re, im, w0.astype(_MXU_DTYPE), b0)        # (B, C*T, D)
    h = h.reshape(BC, T, D)                                         # free reshape

    # pad T to a multiple of 8 so in-kernel chunk starts stay 8-aligned; padded frames
    # are masked as keys (k < ilen) and their query outputs are discarded at the end.
    T_pad = _round_up(T, 8)
    if T_pad != T:
        h = jnp.pad(h, ((0, 0), (0, T_pad - T), (0, 0)))

    ilens_bc = jnp.repeat(ilens.astype(jnp.int32), C)               # (BC,)

    for layer in params["layers"]:
        (wq, bq), (wk, bk), (wv, bv) = layer["wq"], layer["wk"], layer["wv"]
        # fuse Q/K/V weights; fold 1/sqrt(dk) into the Wq/bq slice; pre-cast to bf16
        wqkv = jnp.concatenate([wq * scale, wk, wv], axis=1).astype(_MXU_DTYPE)
        bqkv = jnp.concatenate([bq * scale, bk, bv], axis=0)
        wo, bo = layer["wo"]
        g1, be1 = layer["ln1"]
        w1, bf1 = layer["ff1"]
        w2, bf2 = layer["ff2"]
        g2, be2 = layer["ln2"]
        h = encoder_layer(h, ilens_bc, wqkv, bqkv,
                          wo.astype(_MXU_DTYPE), bo, g1, be1,
                          w1.astype(_MXU_DTYPE), bf1, w2.astype(_MXU_DTYPE), bf2,
                          g2, be2, n_heads=n_heads, window=window)

    if T_pad != T:
        h = h[:, :T, :]

    # all nmask sigmoid heads in one lane-dense matmul
    nmask = len(params["mask_linears"])
    wm = jnp.concatenate([w for (w, _) in params["mask_linears"]],
                         axis=1).astype(_MXU_DTYPE)
    bm = jnp.concatenate([b for (_, b) in params["mask_linears"]], axis=0)
    m_all = mask_heads(h.reshape(BC * T, D), wm, bm)                # (BC*T, nmask*F)
    m_all = m_all.reshape(B, C, T, nmask, Freq)

    masks = []
    for j in range(nmask):
        m = m_all[:, :, :, j, :]                  # (B, C, T, F)
        # reference's masked_fill here is non-in-place and discarded -> no-op.
        m = jnp.transpose(m, (0, 3, 1, 2))        # (B, F, C, T)
        # T == input_length, so the reference's trailing F.pad never triggers.
        masks.append(m)
    return tuple(masks), ilens


# --------------------------------------------------------------------------
# Demo
# --------------------------------------------------------------------------

if __name__ == "__main__":
    # Feature dims chosen as multiples of 128 so all kernel stores are lane-dense;
    # the kernels are shape-general and also work for e.g. Freq=16, adim=32.
    B, Freq, C, T = 2, 128, 4, 32          # batch, freq-bins (idim), channels, frames
    adim, n_heads, units = 128, 4, 256     # attention_dim, attention_heads, linear_units
    num_blocks, nmask, window = 2, 1, 15   # scaled-down num_blocks; default window

    key = jax.random.PRNGKey(0)
    k1, k2, k3 = jax.random.split(key, 3)
    xs_real = jax.random.normal(k1, (B, Freq, C, T), jnp.float32)
    xs_imag = jax.random.normal(k2, (B, Freq, C, T), jnp.float32)
    ilens = jnp.array([32, 24], dtype=jnp.int32)

    params = init_params(k3, Freq, adim, units, num_blocks, nmask)

    masks, out_ilens = mask_estimator_forward(
        params, xs_real, xs_imag, ilens, n_heads=n_heads, window=window)
    masks = jax.block_until_ready(masks)

    m0 = masks[0]
    assert m0.shape == (B, Freq, C, T), m0.shape
    assert bool(jnp.all(jnp.isfinite(m0)))
    assert bool(jnp.all((m0 >= 0.0) & (m0 <= 1.0)))
    assert out_ilens.shape == (B,)
    print("KERNEL_OK")
</pallas_src>

<mosaic_0001>
module attributes {stable_mosaic.version = 11 : i64} {
  func.func @_mag_proj_kernel(%arg0: i32, %arg1: i32, %arg2: memref<1x128x128xf32, #tpu.memory_space<vmem>>, %arg3: memref<1x128x128xf32, #tpu.memory_space<vmem>>, %arg4: memref<128x128xbf16, #tpu.memory_space<vmem>>, %arg5: memref<1x128xf32, #tpu.memory_space<vmem>>, %arg6: memref<1x128x128xf32, #tpu.memory_space<vmem>>) attributes {dimension_semantics = [#tpu.dimension_semantics<parallel>, #tpu.dimension_semantics<parallel>], iteration_bounds = array<i64: 2, 1>, scalar_prefetch = 0 : i64, scratch_operands = 0 : i64, tpu.core_type = #tpu.core_type<tc>, window_params = [{transform_indices = @transform_0, window_bounds = array<i64: 1, 128, 128>}, {transform_indices = @transform_1, window_bounds = array<i64: 1, 128, 128>}, {pipeline_mode = #tpu.pipeline_mode<synchronous>, transform_indices = @transform_2, window_bounds = array<i64: 128, 128>}, {pipeline_mode = #tpu.pipeline_mode<synchronous>, transform_indices = @transform_3, window_bounds = array<i64: 1, 128>}, {transform_indices = @transform_4, window_bounds = array<i64: 1, 128, 128>}]} {
    %c0 = arith.constant 0 : index
    %c0_0 = arith.constant 0 : index
    %c0_1 = arith.constant 0 : index
    %0 = vector.load %arg2[%c0, %c0_0, %c0_1] : memref<1x128x128xf32, #tpu.memory_space<vmem>>, vector<1x128x128xf32>
    %1 = vector.shape_cast %0 : vector<1x128x128xf32> to vector<128x128xf32>
    %c0_2 = arith.constant 0 : index
    %c0_3 = arith.constant 0 : index
    %c0_4 = arith.constant 0 : index
    %2 = vector.load %arg3[%c0_2, %c0_3, %c0_4] : memref<1x128x128xf32, #tpu.memory_space<vmem>>, vector<1x128x128xf32>
    %3 = vector.shape_cast %2 : vector<1x128x128xf32> to vector<128x128xf32>
    %4 = arith.mulf %1, %1 : vector<128x128xf32>
    %5 = arith.mulf %3, %3 : vector<128x128xf32>
    %6 = arith.addf %4, %5 : vector<128x128xf32>
    %7 = math.sqrt %6 : vector<128x128xf32>
    %8 = arith.truncf %7 : vector<128x128xf32> to vector<128x128xbf16>
    %c0_5 = arith.constant 0 : index
    %c0_6 = arith.constant 0 : index
    %9 = vector.load %arg4[%c0_5, %c0_6] : memref<128x128xbf16, #tpu.memory_space<vmem>>, vector<128x128xbf16>
    %cst = arith.constant dense<0.000000e+00> : vector<128x128xf32>
    %10 = tpu.matmul %8, %9, %cst {dimension_numbers = #tpu.dot_dimension_numbers<[0], [0], [1], [1], [0, 1, 1, 1], [], []>} : vector<128x128xbf16>, vector<128x128xbf16>, vector<128x128xf32> -> vector<128x128xf32>
    %c0_7 = arith.constant 0 : index
    %c0_8 = arith.constant 0 : index
    %11 = vector.load %arg5[%c0_7, %c0_8] : memref<1x128xf32, #tpu.memory_space<vmem>>, vector<1x128xf32>
    %12 = vector.broadcast %11 : vector<1x128xf32> to vector<128x128xf32>
    %13 = arith.addf %10, %12 : vector<128x128xf32>
    %c0_9 = arith.constant 0 : index
    %c0_10 = arith.constant 0 : index
    %c0_11 = arith.constant 0 : index
    %14 = vector.load %arg6[%c0_9, %c0_10, %c0_11] : memref<1x128x128xf32, #tpu.memory_space<vmem>>, vector<1x128x128xf32>
    %15 = vector.shape_cast %14 : vector<1x128x128xf32> to vector<128x128xf32>
    %16 = vector.shape_cast %13 : vector<128x128xf32> to vector<1x128x128xf32>
    tpu.vector_store %arg6[%c0_9, %c0_10, %c0_11], %16 {strides = array<i32>} : memref<1x128x128xf32, #tpu.memory_space<vmem>>, vector<1x128x128xf32>,
    return
  }
  func.func @transform_0(%arg0: i32, %arg1: i32) -> (i32, i32, i32) {
    %c0_i32 = arith.constant 0 : i32
    %c0_i32_0 = arith.constant 0 : i32
    return %arg0, %c0_i32, %arg1 : i32, i32, i32
  }
  func.func @transform_1(%arg0: i32, %arg1: i32) -> (i32, i32, i32) {
    %c0_i32 = arith.constant 0 : i32
    %c0_i32_0 = arith.constant 0 : i32
    return %arg0, %c0_i32, %arg1 : i32, i32, i32
  }
  func.func @transform_2(%arg0: i32, %arg1: i32) -> (i32, i32) {
    %c0_i32 = arith.constant 0 : i32
    %c0_i32_0 = arith.constant 0 : i32
    %c0_i32_1 = arith.constant 0 : i32
    return %c0_i32, %c0_i32_0 : i32, i32
  }
  func.func @transform_3(%arg0: i32, %arg1: i32) -> (i32, i32) {
    %c0_i32 = arith.constant 0 : i32
    %c0_i32_0 = arith.constant 0 : i32
    %c0_i32_1 = arith.constant 0 : i32
    return %c0_i32, %c0_i32_0 : i32, i32
  }
  func.func @transform_4(%arg0: i32, %arg1: i32) -> (i32, i32, i32) {
    %c0_i32 = arith.constant 0 : i32
    %c0_i32_0 = arith.constant 0 : i32
    return %arg0, %arg1, %c0_i32 : i32, i32, i32
  }
}

</mosaic_0001>

<llo_original>
// kernel: tpu_custom_call.1
$region0: #{tpu_custom_call.1}
  #allocation0 [shape = 'u32[]', space=smem, size = 0x4, offset = 0x4, fixed_abs, tag = 'smem constant byte address 0x4 - core index']
  #allocation1 [shape = 'u32[144,128]{1,0:T(1,128)}', space=vmem, size = 0x12000, scoped, tag = 'internal scratch']
  %s0 = inlined_call_operand.hbm [shape: f32[2,128,128], index: 0, kind: input, shape index: {}]
  %s1 = inlined_call_operand.hbm [shape: f32[2,128,128], index: 1, kind: input, shape index: {}]
  %s2 = inlined_call_operand.hbm [shape: bf16[128,128], index: 2, kind: input, shape index: {}]
  %s3 = inlined_call_operand.vmem [shape: f32[1,128], index: 3, kind: input, shape index: {}]
  %s4 = inlined_call_operand.hbm [shape: f32[2,128,128], index: 4, kind: output, shape index: {}]
  %s5 = sld [smem:[#allocation0]]
  $region61: #{tpu_custom_call.1} parent=0
    _
  %s7 = ssub.s32 1, %s5
  %s8 = scalar_select 0, %s7, %s5
  $region1: #{tpu_custom_call.1} parent=0
    #allocation2 [shape = 'u8[131072]{0}', space=vmem, size = 0x20000, scoped, tag = 'input window, operand 0']
    #allocation3 [shape = 's32[2]{0}', space=sflag, size = 0x8, scoped, tag = 'scoped memory for tpu_custom_call.1']
    #allocation4 [shape = 's32[2]{0}', space=sflag, size = 0x8, scoped, tag = 'scoped memory for tpu_custom_call.1']
    #allocation5 [shape = 'u8[131072]{0}', space=vmem, size = 0x20000, scoped, tag = 'input window, operand 1']
    #allocation6 [shape = 's32[2]{0}', space=sflag, size = 0x8, scoped, tag = 'scoped memory for tpu_custom_call.1']
    #allocation7 [shape = 'u8[32768]{0}', space=vmem, size = 0x8000, scoped, tag = 'input window, operand 2, single buffered']
    #allocation8 [shape = 'u8[131072]{0}', space=vmem, size = 0x20000, scoped, tag = 'output window, operand 0']
    %9 = vsyncpa [#allocation3], 0
    %s10 = scalar_lea.sflag [#allocation3], 1
    %11 = vsyncpa %s10, 0
    %12 = vsyncpa [#allocation6], 0
    %s13 = scalar_lea.sflag [#allocation6], 1
    %14 = vsyncpa %s13, 0
    %15 = vsyncpa [#allocation4], 0
    %s16 = scalar_lea.sflag [#allocation4], 1
    %17 = vsyncpa %s16, 0
    loop: start=0, step=1, limit=4
    $region2: #{tpu_custom_call.1} parent=1 // loop_pre_header
      _
    $region3: #{tpu_custom_call.1} parent=1 // loop_header
      %s19 = sphi 0, %s23
      %p20 = scmp.ge.s32.totalorder %s19, 4
      %s26 = sphi 0, %s38
      %s27 = sphi 0, %s34
      %s28 = sphi 0, %s26
      %s29 = sphi 0, %s27
      %s30 = sphi 0, %s28
      %s31 = sphi 0, %s29
      %s43 = sphi 0, %s45
      %s46 = sphi 0, %s43
      %s47 = sphi 0, %s46
      %s63 = sphi 0, %s47
      %s71 = sphi 0, %s73
      %s74 = sphi 0, %s71
      %s75 = sphi 0, %s74
      %s91 = sphi 0, %s75
      %s95 = sphi 0, %s95
      %s97 = sphi 0, %s95
      %s98 = sphi 0, %s97
      %s112 = sphi 0, %s98
      %s116 = sphi 0, %s116
      %s118 = sphi 0, %s116
      %s119 = sphi 0, %s118
      %s133 = sphi 0, %s119
      %s141 = sphi 0, %s143
      %s144 = sphi 0, %s141
      %s145 = sphi 0, %s144
      %s161 = sphi 0, %s145
    $region4: #{tpu_custom_call.1} parent=1 // loop_header_branch
      %22 = sbr.rel (%p20) target = $region8
    $region5: #{tpu_custom_call.1} parent=1 // loop_body
      %s24 = ssub.s32 %s19, 1
      %s25 = ssub.s32 %s19, 2
      %s32 = sadd.s32 1, %s27
      %p33 = scmp.ge.s32.totalorder %s32, 1
      %s34 = scalar_select %p33, 0, %s32
      %s35 = sadd.s32 1, %s26
      %s36 = scalar_select %p33, %s35, %s26
      %p37 = scmp.ge.s32.totalorder %s36, 2
      %s38 = scalar_select %p37, 0, %s36
      %s39 = ssub.s32 %s26, %s38
      %s40 = ssub.s32 %s27, %s34
      %s41 = sor.u32 %s39, %s40
      %p42 = scmp.eq.s32.totalorder %s41, 0
      %s44 = sadd.s32 %s43, 1
      %s45 = scalar_select %p42, %s43, %s44
      %p48 = pneg %p42
      %p49 = scmp.eq.s32.totalorder %s19, 1
      %p50 = por %p48, %p49
      %p51 = scmp.ne.s32.totalorder %s43, %s46
      %p52 = scmp.eq.s32.totalorder %s19, 0
      %p53 = por %p51, %p52
      %p54 = scmp.ne.s32.totalorder %s43, %s46
      %p55 = scmp.eq.s32.totalorder %s24, 1
      %p56 = por %p54, %p55
      %p57 = scmp.ne.s32.totalorder %s46, %s47
      %p58 = scmp.eq.s32.totalorder %s24, 0
      %p59 = por %p57, %p58
      %p60 = scmp.ne.s32.totalorder %s46, %s47
      %p61 = scmp.eq.s32.totalorder %s25, 1
      %p62 = por %p60, %p61
      %p64 = scmp.ne.s32.totalorder %s47, %s63
      %p65 = scmp.eq.s32.totalorder %s25, 0
      %p66 = por %p64, %p65
      %s67 = ssub.s32 %s26, %s38
      %s68 = ssub.s32 %s27, %s34
      %s69 = sor.u32 %s67, %s68
      %p70 = scmp.eq.s32.totalorder %s69, 0
      %s72 = sadd.s32 %s71, 1
      %s73 = scalar_select %p70, %s71, %s72
      %p76 = pneg %p70
      %p77 = scmp.eq.s32.totalorder %s19, 1
      %p78 = por %p76, %p77
      %p79 = scmp.ne.s32.totalorder %s71, %s74
      %p80 = scmp.eq.s32.totalorder %s19, 0
      %p81 = por %p79, %p80
      %p82 = scmp.ne.s32.totalorder %s71, %s74
      %p83 = scmp.eq.s32.totalorder %s24, 1
      %p84 = por %p82, %p83
      %p85 = scmp.ne.s32.totalorder %s74, %s75
      %p86 = scmp.eq.s32.totalorder %s24, 0
      %p87 = por %p85, %p86
      %p88 = scmp.ne.s32.totalorder %s74, %s75
      %p89 = scmp.eq.s32.totalorder %s25, 1
      %p90 = por %p88, %p89
      %p92 = scmp.ne.s32.totalorder %s75, %s91
      %p93 = scmp.eq.s32.totalorder %s25, 0
      %p94 = por %p92, %p93
      %s96 = sadd.s32 %s95, 1
      %p99 = scmp.eq.s32.totalorder %s19, 1
      %p100 = scmp.ne.s32.totalorder %s95, %s97
      %p101 = scmp.eq.s32.totalorder %s19, 0
      %p102 = por %p100, %p101
      %p103 = scmp.ne.s32.totalorder %s95, %s97
      %p104 = scmp.eq.s32.totalorder %s24, 1
      %p105 = por %p103, %p104
      %p106 = scmp.ne.s32.totalorder %s97, %s98
      %p107 = scmp.eq.s32.totalorder %s24, 0
      %p108 = por %p106, %p107
      %p109 = scmp.ne.s32.totalorder %s97, %s98
      %p110 = scmp.eq.s32.totalorder %s25, 1
      %p111 = por %p109, %p110
      %p113 = scmp.ne.s32.totalorder %s98, %s112
      %p114 = scmp.eq.s32.totalorder %s25, 0
      %p115 = por %p113, %p114
      %s117 = sadd.s32 %s116, 1
      %p120 = scmp.eq.s32.totalorder %s19, 1
      %p121 = scmp.ne.s32.totalorder %s116, %s118
      %p122 = scmp.eq.s32.totalorder %s19, 0
      %p123 = por %p121, %p122
      %p124 = scmp.ne.s32.totalorder %s116, %s118
      %p125 = scmp.eq.s32.totalorder %s24, 1
      %p126 = por %p124, %p125
      %p127 = scmp.ne.s32.totalorder %s118, %s119
      %p128 = scmp.eq.s32.totalorder %s24, 0
      %p129 = por %p127, %p128
      %p130 = scmp.ne.s32.totalorder %s118, %s119
      %p131 = scmp.eq.s32.totalorder %s25, 1
      %p132 = por %p130, %p131
      %p134 = scmp.ne.s32.totalorder %s119, %s133
      %p135 = scmp.eq.s32.totalorder %s25, 0
      %p136 = por %p134, %p135
      %s137 = ssub.s32 %s26, %s38
      %s138 = ssub.s32 %s27, %s34
      %s139 = sor.u32 %s137, %s138
      %p140 = scmp.eq.s32.totalorder %s139, 0
      %s142 = sadd.s32 %s141, 1
      %s143 = scalar_select %p140, %s141, %s142
      %p146 = pneg %p140
      %p147 = scmp.eq.s32.totalorder %s19, 1
      %p148 = por %p146, %p147
      %p149 = scmp.ne.s32.totalorder %s141, %s144
      %p150 = scmp.eq.s32.totalorder %s19, 0
      %p151 = por %p149, %p150
      %p152 = scmp.ne.s32.totalorder %s141, %s144
      %p153 = scmp.eq.s32.totalorder %s24, 1
      %p154 = por %p152, %p153
      %p155 = scmp.ne.s32.totalorder %s144, %s145
      %p156 = scmp.eq.s32.totalorder %s24, 0
      %p157 = por %p155, %p156
      %p158 = scmp.ne.s32.totalorder %s144, %s145
      %p159 = scmp.eq.s32.totalorder %s25, 1
      %p160 = por %p158, %p159
      %p162 = scmp.ne.s32.totalorder %s145, %s161
      %p163 = scmp.eq.s32.totalorder %s25, 0
      %p164 = por %p162, %p163
      %p165 = scmp.le.s32.totalorder 1, %s19
      %p166 = scmp.lt.s32.totalorder %s19, 3
      %p167 = pnand %p165, %p166
      %p168 = pneg %p167
      // Predicated region
      $region9: #{tpu_custom_call.1} parent=5 // pred_check
        _
      $region10: #{tpu_custom_call.1} parent=5 // pred_check_branch
        %170 = sbr.rel (%p167) target = $region12
      $region11: #{tpu_custom_call.1} parent=5 // pred_region
        %s171 = ssub.s32 %s19, 1
        // Predicated region
        $region13: #{tpu_custom_call.1} parent=11 // pred_check
          %p172 = pneg %p108
        $region14: #{tpu_custom_call.1} parent=11 // pred_check_branch
          %174 = sbr.rel (%p172) target = $region16
        $region15: #{tpu_custom_call.1} parent=11 // pred_region
          %s176 = ssub.s32 1024, 1024
          %177 = vsyncadd [#allocation6], %s176
          %s178 = sshll.u32 [#allocation7], 4
          %s179 = int_to_ptr.vmem [resolvable:$true] %s178
          %184 = dma.hbm_to_vmem [thread:$0]  %s2, 1024, %s179, [#allocation6], 64, 64, 4
        $region16: #{tpu_custom_call.1} parent=11 // pred_fallthru
          _
        // Predicated region
        $region17: #{tpu_custom_call.1} parent=11 // pred_check
          %p185 = pneg %p129
        $region18: #{tpu_custom_call.1} parent=11 // pred_check_branch
          %187 = sbr.rel (%p185) target = $region20
        $region19: #{tpu_custom_call.1} parent=11 // pred_region
          _
        $region20: #{tpu_custom_call.1} parent=11 // pred_fallthru
          _
      $region12: #{tpu_custom_call.1} parent=5 // pred_fallthru
        _
      %p188 = scmp.lt.s32.totalorder %s19, 2
      // Predicated region
      $region21: #{tpu_custom_call.1} parent=5 // pred_check
        %p189 = pneg %p188
      $region22: #{tpu_custom_call.1} parent=5 // pred_check_branch
        %191 = sbr.rel (%p189) target = $region24
      $region23: #{tpu_custom_call.1} parent=5 // pred_region
        // Predicated region
        $region25: #{tpu_custom_call.1} parent=23 // pred_check
          %p192 = pneg %p53
        $region26: #{tpu_custom_call.1} parent=23 // pred_check_branch
          %194 = sbr.rel (%p192) target = $region28
        $region27: #{tpu_custom_call.1} parent=23 // pred_region
          %s195 = sand.u32 %s43, 1
          %s196 = scalar_lea.sflag [#allocation3], %s195
          %s197 = sand.u32 %s43, 1
          %s198 = smul.addr %s197, 128
          %s199 = scalar_lea.vmem [#allocation2], %s198
          %s201 = ssub.s32 2048, 2048
          %202 = vsyncadd %s196, %s201
          %s203 = smul.addr %s26, 16
          %s204 = sadd.s32 %s27, %s203
          %s205 = smul.addr %s204, 128
          %s206 = scalar_lea.hbm %s0, %s205
          %s207 = sshll.u32 %s199, 4
          %s208 = int_to_ptr.vmem [resolvable:$true] %s207
          %213 = dma.hbm_to_vmem [thread:$0]  %s206, 2048, %s208, %s196, 128, 128, 8
        $region28: #{tpu_custom_call.1} parent=23 // pred_fallthru
          _
        // Predicated region
        $region29: #{tpu_custom_call.1} parent=23 // pred_check
          %p214 = pneg %p81
        $region30: #{tpu_custom_call.1} parent=23 // pred_check_branch
          %216 = sbr.rel (%p214) target = $region32
        $region31: #{tpu_custom_call.1} parent=23 // pred_region
          %s217 = sand.u32 %s19, 1
          %s218 = scalar_lea.sflag [#allocation6], %s217
          %s219 = sand.u32 %s71, 1
          %s220 = smul.addr %s219, 128
          %s221 = scalar_lea.vmem [#allocation5], %s220
          %s223 = ssub.s32 2048, 2048
          %224 = vsyncadd %s218, %s223
          %s225 = smul.addr %s26, 16
          %s226 = sadd.s32 %s27, %s225
          %s227 = smul.addr %s226, 128
          %s228 = scalar_lea.hbm %s1, %s227
          %s229 = sshll.u32 %s221, 4
          %s230 = int_to_ptr.vmem [resolvable:$true] %s229
          %235 = dma.hbm_to_vmem [thread:$0]  %s228, 2048, %s230, %s218, 128, 128, 8
        $region32: #{tpu_custom_call.1} parent=23 // pred_fallthru
          _
      $region24: #{tpu_custom_call.1} parent=5 // pred_fallthru
        _
      %p236 = scmp.le.s32.totalorder 1, %s19
      %p237 = scmp.lt.s32.totalorder %s19, 3
      %p238 = pnand %p236, %p237
      %p239 = pneg %p238
      // Predicated region
      $region33: #{tpu_custom_call.1} parent=5 // pred_check
        _
      $region34: #{tpu_custom_call.1} parent=5 // pred_check_branch
        %241 = sbr.rel (%p238) target = $region36
      $region35: #{tpu_custom_call.1} parent=5 // pred_region
        %s242 = ssub.s32 %s19, 1
        %s243 = sand.u32 %s46, 1
        %s244 = scalar_lea.sflag [#allocation3], %s243
        %s245 = sand.u32 %s46, 1
        %s246 = smul.addr %s245, 128
        %s247 = scalar_lea.vmem [#allocation2], %s246
        // Predicated region
        $region37: #{tpu_custom_call.1} parent=35 // pred_check
          %p248 = pneg %p59
        $region38: #{tpu_custom_call.1} parent=35 // pred_check_branch
          %250 = sbr.rel (%p248) target = $region40
        $region39: #{tpu_custom_call.1} parent=35 // pred_region
          %251 = dma.done %s244, 2048
        $region40: #{tpu_custom_call.1} parent=35 // pred_fallthru
          _
        %s252 = sand.u32 %s24, 1
        %s253 = scalar_lea.sflag [#allocation6], %s252
        %s254 = sand.u32 %s74, 1
        %s255 = smul.addr %s254, 128
        %s256 = scalar_lea.vmem [#allocation5], %s255
        // Predicated region
        $region41: #{tpu_custom_call.1} parent=35 // pred_check
          %p257 = pneg %p87
        $region42: #{tpu_custom_call.1} parent=35 // pred_check_branch
          %259 = sbr.rel (%p257) target = $region44
        $region43: #{tpu_custom_call.1} parent=35 // pred_region
          %260 = dma.done %s253, 2048
        $region44: #{tpu_custom_call.1} parent=35 // pred_fallthru
          _
        // Predicated region
        $region45: #{tpu_custom_call.1} parent=35 // pred_check
          %p261 = pneg %p108
        $region46: #{tpu_custom_call.1} parent=35 // pred_check_branch
          %263 = sbr.rel (%p261) target = $region48
        $region47: #{tpu_custom_call.1} parent=35 // pred_region
          %264 = dma.done [#allocation6], 1024
        $region48: #{tpu_custom_call.1} parent=35 // pred_fallthru
          _
        %s265 = sand.u32 %s46, 1
        %s266 = scalar_lea.sflag [#allocation3], %s265
        %s267 = sand.u32 %s46, 1
        %s268 = smul.addr %s267, 128
        %s269 = scalar_lea.vmem [#allocation2], %s268
        %p270 = pneg %p59
        %p271 = pneg %p56
        %s272 = sand.u32 %s24, 1
        %s273 = scalar_lea.sflag [#allocation6], %s272
        %s274 = sand.u32 %s74, 1
        %s275 = smul.addr %s274, 128
        %s276 = scalar_lea.vmem [#allocation5], %s275
        %p277 = pneg %p87
        %p278 = pneg %p84
        %p279 = pneg %p108
        %p280 = pneg %p105
        %p281 = pneg %p129
        %p282 = pneg %p126
        %p283 = pneg %p157
        %p284 = pneg %p154
        %s285 = sand.u32 %s144, 1
        %s286 = scalar_lea.sflag [#allocation4], %s285
        %s287 = sand.u32 %s144, 1
        %s288 = smul.addr %s287, 128
        %s289 = scalar_lea.vmem [#allocation8], %s288
        %s290 = smul.u32 16, %s29
        %v292 = vld [vmem:[%s247] sm:$0xff]
        %v293 = vld [vmem:[%s247 + $0x8] sm:$0xff]
        %v294 = vld [vmem:[%s247 + $0x10] sm:$0xff]
        %v295 = vld [vmem:[%s247 + $0x18] sm:$0xff]
        %v296 = vld [vmem:[%s247 + $0x20] sm:$0xff]
        %v297 = vld [vmem:[%s247 + $0x28] sm:$0xff]
        %v298 = vld [vmem:[%s247 + $0x30] sm:$0xff]
        %v299 = vld [vmem:[%s247 + $0x38] sm:$0xff]
        %v300 = vld [vmem:[%s247 + $0x40] sm:$0xff]
        %v301 = vld [vmem:[%s247 + $0x48] sm:$0xff]
        %v302 = vld [vmem:[%s247 + $0x50] sm:$0xff]
        %v303 = vld [vmem:[%s247 + $0x58] sm:$0xff]
        %v304 = vld [vmem:[%s247 + $0x60] sm:$0xff]
        %v305 = vld [vmem:[%s247 + $0x68] sm:$0xff]
        %v306 = vld [vmem:[%s247 + $0x70] sm:$0xff]
        %v307 = vld [vmem:[%s247 + $0x78] sm:$0xff]
        %v308 = vld [vmem:[%s256] sm:$0xff]
        %v309 = vld [vmem:[%s256 + $0x8] sm:$0xff]
        %v310 = vld [vmem:[%s256 + $0x10] sm:$0xff]
        %v311 = vld [vmem:[%s256 + $0x18] sm:$0xff]
        %v312 = vld [vmem:[%s256 + $0x20] sm:$0xff]
        %v313 = vld [vmem:[%s256 + $0x28] sm:$0xff]
        %v314 = vld [vmem:[%s256 + $0x30] sm:$0xff]
        %v315 = vld [vmem:[%s256 + $0x38] sm:$0xff]
        %v316 = vld [vmem:[%s256 + $0x40] sm:$0xff]
        %v317 = vld [vmem:[%s256 + $0x48] sm:$0xff]
        %v318 = vld [vmem:[%s256 + $0x50] sm:$0xff]
        %v319 = vld [vmem:[%s256 + $0x58] sm:$0xff]
        %v320 = vld [vmem:[%s256 + $0x60] sm:$0xff]
        %v321 = vld [vmem:[%s256 + $0x68] sm:$0xff]
        %v322 = vld [vmem:[%s256 + $0x70] sm:$0xff]
        %v323 = vld [vmem:[%s256 + $0x78] sm:$0xff]
        %v324 = vmul.f32 %v292, %v292
        %v325 = vmul.f32 %v293, %v293
        %v326 = vmul.f32 %v294, %v294
        %v327 = vmul.f32 %v295, %v295
        %v328 = vmul.f32 %v296, %v296
        %v329 = vmul.f32 %v297, %v297
        %v330 = vmul.f32 %v298, %v298
        %v331 = vmul.f32 %v299, %v299
        %v332 = vmul.f32 %v300, %v300
        %v333 = vmul.f32 %v301, %v301
        %v334 = vmul.f32 %v302, %v302
        %v335 = vmul.f32 %v303, %v303
        %v336 = vmul.f32 %v304, %v304
        %v337 = vmul.f32 %v305, %v305
        %v338 = vmul.f32 %v306, %v306
        %v339 = vmul.f32 %v307, %v307
        %v340 = vmul.f32 %v308, %v308
        %v341 = vmul.f32 %v309, %v309
        %v342 = vmul.f32 %v310, %v310
        %v343 = vmul.f32 %v311, %v311
        %v344 = vmul.f32 %v312, %v312
        %v345 = vmul.f32 %v313, %v313
        %v346 = vmul.f32 %v314, %v314
        %v347 = vmul.f32 %v315, %v315
        %v348 = vmul.f32 %v316, %v316
        %v349 = vmul.f32 %v317, %v317
        %v350 = vmul.f32 %v318, %v318
        %v351 = vmul.f32 %v319, %v319
        %v352 = vmul.f32 %v320, %v320
        %v353 = vmul.f32 %v321, %v321
        %v354 = vmul.f32 %v322, %v322
        %v355 = vmul.f32 %v323, %v323
        %v356 = vadd.f32 %v324, %v340
        %v357 = vadd.f32 %v325, %v341
        %v358 = vadd.f32 %v326, %v342
        %v359 = vadd.f32 %v327, %v343
        %v360 = vadd.f32 %v328, %v344
        %v361 = vadd.f32 %v329, %v345
        %v362 = vadd.f32 %v330, %v346
        %v363 = vadd.f32 %v331, %v347
        %v364 = vadd.f32 %v332, %v348
        %v365 = vadd.f32 %v333, %v349
        %v366 = vadd.f32 %v334, %v350
        %v367 = vadd.f32 %v335, %v351
        %v368 = vadd.f32 %v336, %v352
        %v369 = vadd.f32 %v337, %v353
        %v370 = vadd.f32 %v338, %v354
        %v371 = vadd.f32 %v339, %v355
        %v372 = vrsqrt.pop %v356
        %v373 = vmul.f32 %v356, %v372
        %vm374 = vcmp.eq.f32.partialorder %v356, inf
        %v375 = vsel %vm374, %v356, %v373
        %vm376 = vcmp.eq.f32.partialorder %v356, 0.0
        %v377 = vand.u32 %v356, 2147483648
        %v378 = vsel %vm376, %v377, %v375
        %v379 = vrsqrt.pop %v357
        %v380 = vmul.f32 %v357, %v379
        %vm381 = vcmp.eq.f32.partialorder %v357, inf
        %v382 = vsel %vm381, %v357, %v380
        %vm383 = vcmp.eq.f32.partialorder %v357, 0.0
        %v384 = vand.u32 %v357, 2147483648
        %v385 = vsel %vm383, %v384, %v382
        %v386 = vrsqrt.pop %v358
        %v387 = vmul.f32 %v358, %v386
        %vm388 = vcmp.eq.f32.partialorder %v358, inf
        %v389 = vsel %vm388, %v358, %v387
        %vm390 = vcmp.eq.f32.partialorder %v358, 0.0
        %v391 = vand.u32 %v358, 2147483648
        %v392 = vsel %vm390, %v391, %v389
        %v393 = vrsqrt.pop %v359
        %v394 = vmul.f32 %v359, %v393
        %vm395 = vcmp.eq.f32.partialorder %v359, inf
        %v396 = vsel %vm395, %v359, %v394
        %vm397 = vcmp.eq.f32.partialorder %v359, 0.0
        %v398 = vand.u32 %v359, 2147483648
        %v399 = vsel %vm397, %v398, %v396
        %v400 = vrsqrt.pop %v360
        %v401 = vmul.f32 %v360, %v400
        %vm402 = vcmp.eq.f32.partialorder %v360, inf
        %v403 = vsel %vm402, %v360, %v401
        %vm404 = vcmp.eq.f32.partialorder %v360, 0.0
        %v405 = vand.u32 %v360, 2147483648
        %v406 = vsel %vm404, %v405, %v403
        %v407 = vrsqrt.pop %v361
        %v408 = vmul.f32 %v361, %v407
        %vm409 = vcmp.eq.f32.partialorder %v361, inf
        %v410 = vsel %vm409, %v361, %v408
        %vm411 = vcmp.eq.f32.partialorder %v361, 0.0
        %v412 = vand.u32 %v361, 2147483648
        %v413 = vsel %vm411, %v412, %v410
        %v414 = vrsqrt.pop %v362
        %v415 = vmul.f32 %v362, %v414
        %vm416 = vcmp.eq.f32.partialorder %v362, inf
        %v417 = vsel %vm416, %v362, %v415
        %vm418 = vcmp.eq.f32.partialorder %v362, 0.0
        %v419 = vand.u32 %v362, 2147483648
        %v420 = vsel %vm418, %v419, %v417
        %v421 = vrsqrt.pop %v363
        %v422 = vmul.f32 %v363, %v421
        %vm423 = vcmp.eq.f32.partialorder %v363, inf
        %v424 = vsel %vm423, %v363, %v422
        %vm425 = vcmp.eq.f32.partialorder %v363, 0.0
        %v426 = vand.u32 %v363, 2147483648
        %v427 = vsel %vm425, %v426, %v424
        %v428 = vrsqrt.pop %v364
        %v429 = vmul.f32 %v364, %v428
        %vm430 = vcmp.eq.f32.partialorder %v364, inf
        %v431 = vsel %vm430, %v364, %v429
        %vm432 = vcmp.eq.f32.partialorder %v364, 0.0
        %v433 = vand.u32 %v364, 2147483648
        %v434 = vsel %vm432, %v433, %v431
        %v435 = vrsqrt.pop %v365
        %v436 = vmul.f32 %v365, %v435
        %vm437 = vcmp.eq.f32.partialorder %v365, inf
        %v438 = vsel %vm437, %v365, %v436
        %vm439 = vcmp.eq.f32.partialorder %v365, 0.0
        %v440 = vand.u32 %v365, 2147483648
        %v441 = vsel %vm439, %v440, %v438
        %v442 = vrsqrt.pop %v366
        %v443 = vmul.f32 %v366, %v442
        %vm444 = vcmp.eq.f32.partialorder %v366, inf
        %v445 = vsel %vm444, %v366, %v443
        %vm446 = vcmp.eq.f32.partialorder %v366, 0.0
        %v447 = vand.u32 %v366, 2147483648
        %v448 = vsel %vm446, %v447, %v445
        %v449 = vrsqrt.pop %v367
        %v450 = vmul.f32 %v367, %v449
        %vm451 = vcmp.eq.f32.partialorder %v367, inf
        %v452 = vsel %vm451, %v367, %v450
        %vm453 = vcmp.eq.f32.partialorder %v367, 0.0
        %v454 = vand.u32 %v367, 2147483648
        %v455 = vsel %vm453, %v454, %v452
        %v456 = vrsqrt.pop %v368
        %v457 = vmul.f32 %v368, %v456
        %vm458 = vcmp.eq.f32.partialorder %v368, inf
        %v459 = vsel %vm458, %v368, %v457
        %vm460 = vcmp.eq.f32.partialorder %v368, 0.0
        %v461 = vand.u32 %v368, 2147483648
        %v462 = vsel %vm460, %v461, %v459
        %v463 = vrsqrt.pop %v369
        %v464 = vmul.f32 %v369, %v463
        %vm465 = vcmp.eq.f32.partialorder %v369, inf
        %v466 = vsel %vm465, %v369, %v464
        %vm467 = vcmp.eq.f32.partialorder %v369, 0.0
        %v468 = vand.u32 %v369, 2147483648
        %v469 = vsel %vm467, %v468, %v466
        %v470 = vrsqrt.pop %v370
        %v471 = vmul.f32 %v370, %v470
        %vm472 = vcmp.eq.f32.partialorder %v370, inf
        %v473 = vsel %vm472, %v370, %v471
        %vm474 = vcmp.eq.f32.partialorder %v370, 0.0
        %v475 = vand.u32 %v370, 2147483648
        %v476 = vsel %vm474, %v475, %v473
        %v477 = vrsqrt.pop %v371
        %v478 = vmul.f32 %v371, %v477
        %vm479 = vcmp.eq.f32.partialorder %v371, inf
        %v480 = vsel %vm479, %v371, %v478
        %vm481 = vcmp.eq.f32.partialorder %v371, 0.0
        %v482 = vand.u32 %v371, 2147483648
        %v483 = vsel %vm481, %v482, %v480
        %v484 = vpack.c.bf16 %v385, %v378
        %v485 = vpack.c.bf16 %v399, %v392
        %v486 = vpack.c.bf16 %v413, %v406
        %v487 = vpack.c.bf16 %v427, %v420
        %v488 = vpack.c.bf16 %v441, %v434
        %v489 = vpack.c.bf16 %v455, %v448
        %v490 = vpack.c.bf16 %v469, %v462
        %v491 = vpack.c.bf16 %v483, %v476
        %v492 = vld [vmem:[#allocation7] sm:$0xf]
        %v493 = vld [vmem:[#allocation7 + $0x4] sm:$0xf]
        %v494 = vld [vmem:[#allocation7 + $0x8] sm:$0xf]
        %v495 = vld [vmem:[#allocation7 + $0xc] sm:$0xf]
        %v496 = vld [vmem:[#allocation7 + $0x10] sm:$0xf]
        %v497 = vld [vmem:[#allocation7 + $0x14] sm:$0xf]
        %v498 = vld [vmem:[#allocation7 + $0x18] sm:$0xf]
        %v499 = vld [vmem:[#allocation7 + $0x1c] sm:$0xf]
        %v500 = vld [vmem:[#allocation7 + $0x20] sm:$0xf]
        %v501 = vld [vmem:[#allocation7 + $0x24] sm:$0xf]
        %v502 = vld [vmem:[#allocation7 + $0x28] sm:$0xf]
        %v503 = vld [vmem:[#allocation7 + $0x2c] sm:$0xf]
        %v504 = vld [vmem:[#allocation7 + $0x30] sm:$0xf]
        %v505 = vld [vmem:[#allocation7 + $0x34] sm:$0xf]
        %v506 = vld [vmem:[#allocation7 + $0x38] sm:$0xf]
        %v507 = vld [vmem:[#allocation7 + $0x3c] sm:$0xf]
        %v508 = vld [vmem:[%s3] sm:$0x1]
        %v510 = vlaneseq
        %v511 = vshrl.u32 %v510, 7
        %v512 = vsub.s32 0, %v511
        %v513 = vrot.slane %v508, %v512
        %515 = vxpose.xlu0.c.b16.start [1/8] %v484, 128
        %516 = vxpose.xlu0.c.b16.cont [2/8] %v485, 128
        %517 = vxpose.xlu0.c.b16.cont [3/8] %v486, 128
        %518 = vxpose.xlu0.c.b16.cont [4/8] %v487, 128
        %519 = vxpose.xlu0.c.b16.cont [5/8] %v488, 128
        %520 = vxpose.xlu0.c.b16.cont [6/8] %v489, 128
        %521 = vxpose.xlu0.c.b16.cont [7/8] %v490, 128
        %522 = vxpose.xlu0.c.b16.end [8/8] %v491, 128
        %v523 = vpop.trf.xlu0
        %v524 = vpop.trf.xlu0
        %v525 = vpop.trf.xlu0
        %v526 = vpop.trf.xlu0
        %v527 = vpop.trf.xlu0
        %v528 = vpop.trf.xlu0
        %v529 = vpop.trf.xlu0
        %v530 = vpop.trf.xlu0
        %v547 = vunpack.c.l.b16 %v492
        %v548 = vunpack.c.l.b16 %v493
        %v549 = vunpack.c.l.b16 %v494
        %v550 = vunpack.c.l.b16 %v495
        %v551 = vunpack.c.l.b16 %v496
        %v552 = vunpack.c.l.b16 %v497
        %v553 = vunpack.c.l.b16 %v498
        %v554 = vunpack.c.l.b16 %v499
        %v555 = vunpack.c.l.b16 %v500
        %v556 = vunpack.c.l.b16 %v501
        %v557 = vunpack.c.l.b16 %v502
        %v558 = vunpack.c.l.b16 %v503
        %v559 = vunpack.c.l.b16 %v504
        %v560 = vunpack.c.l.b16 %v505
        %v561 = vunpack.c.l.b16 %v506
        %v562 = vunpack.c.l.b16 %v507
        %v563 = vpack.c.b16 %v548, %v547
        %v564 = vpack.c.b16 %v550, %v549
        %v565 = vpack.c.b16 %v552, %v551
        %v566 = vpack.c.b16 %v554, %v553
        %v567 = vpack.c.b16 %v556, %v555
        %v568 = vpack.c.b16 %v558, %v557
        %v569 = vpack.c.b16 %v560, %v559
        %v570 = vpack.c.b16 %v562, %v561
        %579 = vmatprep.subr.bf16.mxu0 0
        %580 = vmatpush1.bf16.msra.mxu0 %v563
        %581 = vmatprep.subr.bf16.mxu0 0
        %582 = vmatpush1.bf16.msra.mxu0 %v564
        %583 = vmatprep.subr.bf16.mxu0 0
        %584 = vmatpush1.bf16.msra.mxu0 %v565
        %585 = vmatprep.subr.bf16.mxu0 0
        %586 = vmatpush1.bf16.msra.mxu0 %v566
        %587 = vmatprep.subr.bf16.mxu0 0
        %588 = vmatpush1.bf16.msra.mxu0 %v567
        %589 = vmatprep.subr.bf16.mxu0 0
        %590 = vmatpush1.bf16.msra.mxu0 %v568
        %591 = vmatprep.subr.bf16.mxu0 0
        %592 = vmatpush1.bf16.msra.mxu0 %v569
        %593 = vmatprep.subr.bf16.mxu0 0
        %594 = vmatpush1.bf16.msra.mxu0 %v570
        %595 = vmatprep.subr.bf16.mxu0 0
        %596 = vmatpush1.bf16.msra.mxu0 0
        %597 = vmatprep.subr.bf16.mxu0 0
        %598 = vmatpush1.bf16.msra.mxu0 0
        %599 = vmatprep.subr.bf16.mxu0 0
        %600 = vmatpush1.bf16.msra.mxu0 0
        %601 = vmatprep.subr.bf16.mxu0 0
        %602 = vmatpush1.bf16.msra.mxu0 0
        %603 = vmatprep.subr.bf16.mxu0 0
        %604 = vmatpush1.bf16.msra.mxu0 0
        %605 = vmatprep.subr.bf16.mxu0 0
        %606 = vmatpush1.bf16.msra.mxu0 0
        %607 = vmatprep.subr.bf16.mxu0 0
        %608 = vmatpush1.bf16.msra.mxu0 0
        %609 = vmatprep.subr.bf16.mxu0 0
        %610 = vmatpush1.bf16.msra.mxu0 0
        %611 = vmatprep.mubr.bf16.mxu0 0
        %612 = vmatmul.mubr.bf16.gmra.mrb[0].mxu0 %v523
        %v613 = vpop.f32.mrb[0].mxu0
        %v614 = vadd.f32 %v513, %v613
        %v615 = vpop.f32.mrb[0].mxu0
        %v616 = vpop.f32.mrb[0].mxu0
        %v617 = vadd.f32 %v513, %v616
        %v618 = vpop.f32.mrb[0].mxu0
        %619 = vmatprep.mubr.bf16.mxu0 0
        %620 = vmatmul.mubr.bf16.gmra.mrb[0].mxu0 %v524
        %v621 = vpop.f32.mrb[0].mxu0
        %v622 = vadd.f32 %v513, %v621
        %v623 = vpop.f32.mrb[0].mxu0
        %v624 = vpop.f32.mrb[0].mxu0
        %v625 = vadd.f32 %v513, %v624
        %v626 = vpop.f32.mrb[0].mxu0
        %627 = vmatprep.mubr.bf16.mxu0 0
        %628 = vmatmul.mubr.bf16.gmra.mrb[0].mxu0 %v525
        %v629 = vpop.f32.mrb[0].mxu0
        %v630 = vadd.f32 %v513, %v629
        %v631 = vpop.f32.mrb[0].mxu0
        %v632 = vpop.f32.mrb[0].mxu0
        %v633 = vadd.f32 %v513, %v632
        %v634 = vpop.f32.mrb[0].mxu0
        %635 = vmatprep.mubr.bf16.mxu0 0
        %636 = vmatmul.mubr.bf16.gmra.mrb[0].mxu0 %v526
        %v637 = vpop.f32.mrb[0].mxu0
        %v638 = vadd.f32 %v513, %v637
        %v639 = vpop.f32.mrb[0].mxu0
        %v640 = vpop.f32.mrb[0].mxu0
        %v641 = vadd.f32 %v513, %v640
        %v642 = vpop.f32.mrb[0].mxu0
        %643 = vmatprep.mubr.bf16.mxu0 0
        %644 = vmatmul.mubr.bf16.gmra.mrb[0].mxu0 %v527
        %v645 = vpop.f32.mrb[0].mxu0
        %v646 = vadd.f32 %v513, %v645
        %v647 = vpop.f32.mrb[0].mxu0
        %v648 = vpop.f32.mrb[0].mxu0
        %v649 = vadd.f32 %v513, %v648
        %v650 = vpop.f32.mrb[0].mxu0
        %651 = vmatprep.mubr.bf16.mxu0 0
        %652 = vmatmul.mubr.bf16.gmra.mrb[0].mxu0 %v528
        %v653 = vpop.f32.mrb[0].mxu0
        %v654 = vadd.f32 %v513, %v653
        %v655 = vpop.f32.mrb[0].mxu0
        %v656 = vpop.f32.mrb[0].mxu0
        %v657 = vadd.f32 %v513, %v656
        %v658 = vpop.f32.mrb[0].mxu0
        %659 = vmatprep.mubr.bf16.mxu0 0
        %660 = vmatmul.mubr.bf16.gmra.mrb[0].mxu0 %v529
        %v661 = vpop.f32.mrb[0].mxu0
        %v662 = vadd.f32 %v513, %v661
        %v663 = vpop.f32.mrb[0].mxu0
        %v664 = vpop.f32.mrb[0].mxu0
        %v665 = vadd.f32 %v513, %v664
        %v666 = vpop.f32.mrb[0].mxu0
        %667 = vmatprep.mubr.bf16.mxu0 0
        %668 = vmatmul.mubr.bf16.gmra.mrb[0].mxu0 %v530
        %v669 = vpop.f32.mrb[0].mxu0
        %v670 = vadd.f32 %v513, %v669
        %v671 = vpop.f32.mrb[0].mxu0
        %v672 = vpop.f32.mrb[0].mxu0
        %v673 = vadd.f32 %v513, %v672
        %v674 = vpop.f32.mrb[0].mxu0
        %675 = vdwg.mxu0
        %676 = vst [vmem:[%s289] sm:$0xff] %v614
        %677 = vst [vmem:[%s289 + $0x8] sm:$0xff] %v617
        %678 = vst [vmem:[%s289 + $0x10] sm:$0xff] %v622
        %679 = vst [vmem:[%s289 + $0x18] sm:$0xff] %v625
        %680 = vst [vmem:[%s289 + $0x20] sm:$0xff] %v630
        %681 = vst [vmem:[%s289 + $0x28] sm:$0xff] %v633
        %682 = vst [vmem:[%s289 + $0x30] sm:$0xff] %v638
        %683 = vst [vmem:[%s289 + $0x38] sm:$0xff] %v641
        %684 = vst [vmem:[%s289 + $0x40] sm:$0xff] %v646
        %685 = vst [vmem:[%s289 + $0x48] sm:$0xff] %v649
        %686 = vst [vmem:[%s289 + $0x50] sm:$0xff] %v654
        %687 = vst [vmem:[%s289 + $0x58] sm:$0xff] %v657
        %688 = vst [vmem:[%s289 + $0x60] sm:$0xff] %v662
        %689 = vst [vmem:[%s289 + $0x68] sm:$0xff] %v665
        %690 = vst [vmem:[%s289 + $0x70] sm:$0xff] %v670
        %691 = vst [vmem:[%s289 + $0x78] sm:$0xff] %v673
        %s692 = sand.u32 %s144, 1
        %s693 = scalar_lea.sflag [#allocation4], %s692
        %s694 = sand.u32 %s144, 1
        %s695 = smul.addr %s694, 128
        %s696 = scalar_lea.vmem [#allocation8], %s695
        // Predicated region
        $region49: #{tpu_custom_call.1} parent=35 // pred_check
          %p697 = pneg %p154
        $region50: #{tpu_custom_call.1} parent=35 // pred_check_branch
          %699 = sbr.rel (%p697) target = $region52
        $region51: #{tpu_custom_call.1} parent=35 // pred_region
          %s700 = smul.u32 16, %s29
          %s702 = ssub.s32 2048, 2048
          %703 = vsyncadd %s693, %s702
          %s704 = smul.addr %s28, 16
          %s705 = sadd.s32 %s700, %s704
          %s706 = smul.addr %s705, 128
          %s707 = scalar_lea.hbm %s4, %s706
          %s708 = sshll.u32 %s696, 4
          %s709 = int_to_ptr.vmem [resolvable:$true] %s708
          %714 = dma.vmem_to_hbm [thread:$0]  %s709, 2048, %s707, %s693, 128, 128, 8
        $region52: #{tpu_custom_call.1} parent=35 // pred_fallthru
          _
      $region36: #{tpu_custom_call.1} parent=5 // pred_fallthru
        _
      %p715 = scmp.le.s32.totalorder 2, %s19
      // Predicated region
      $region53: #{tpu_custom_call.1} parent=5 // pred_check
        %p716 = pneg %p715
      $region54: #{tpu_custom_call.1} parent=5 // pred_check_branch
        %718 = sbr.rel (%p716) target = $region56
      $region55: #{tpu_custom_call.1} parent=5 // pred_region
        %s719 = ssub.s32 %s19, 2
        // Predicated region
        $region57: #{tpu_custom_call.1} parent=55 // pred_check
          %p720 = pneg %p160
        $region58: #{tpu_custom_call.1} parent=55 // pred_check_branch
          %722 = sbr.rel (%p720) target = $region60
        $region59: #{tpu_custom_call.1} parent=55 // pred_region
          %s723 = sand.u32 %s145, 1
          %s724 = scalar_lea.sflag [#allocation4], %s723
          %s725 = sand.u32 %s145, 1
          %s726 = smul.addr %s725, 128
          %s727 = scalar_lea.vmem [#allocation8], %s726
          %728 = dma.done %s724, 2048
        $region60: #{tpu_custom_call.1} parent=55 // pred_fallthru
          _
      $region56: #{tpu_custom_call.1} parent=5 // pred_fallthru
        _
    $region6: #{tpu_custom_call.1} parent=1 // loop_footer
      %s23 = sadd.s32 1, %s19
    $region7: #{tpu_custom_call.1} parent=1 // loop_footer_branch
      %18 = sbr.rel target = $region3
    $region8: #{tpu_custom_call.1} parent=1 // loop_exit
      _
    %729 = vsyncpa [#allocation3], 1
    %s730 = scalar_lea.sflag [#allocation3], 1
    %731 = vsyncpa %s730, 1
    %732 = vsyncpa [#allocation6], 1
    %s733 = scalar_lea.sflag [#allocation6], 1
    %734 = vsyncpa %s733, 1
    %735 = vsyncpa [#allocation4], 1
    %s736 = scalar_lea.sflag [#allocation4], 1
    %737 = vsyncpa %s736, 1

</llo_original>
